<compile_context>
chip_gen: v5e
topology: v5e:2x2
jax: 0.10.0
libtpu: 0.0.40
codegen_flags: <defaults>
</compile_context>

<pallas_src>
import math

import jax
import jax.numpy as jnp
from jax.experimental import pallas as pl
from jax.experimental.pallas import tpu as pltpu

# Finite mask fill (flash-attention convention; avoids -inf NaNs in the
# online-softmax recurrence for partially processed rows).
_MASK_VALUE = -0.7 * float(jnp.finfo(jnp.float32).max)


def _default_block():
    """256-wide tiles for v6e/v7x (2x256^2 MXU); 128 for v5e and older."""
    try:
        kind = jax.devices()[0].device_kind.lower()
    except Exception:
        return 256
    if "v5" in kind or "v4" in kind or "v3" in kind or "v2" in kind:
        return 128
    return 256


def _pick_row_tile(n, preferred):
    """Tile for a sublane (second-to-last) dim: prefer x128, then x16/x8, else full."""
    if n <= preferred:
        return n
    for step in (128, 16, 8):
        t = preferred - (preferred % step)
        while t >= step:
            if n % t == 0:
                return t
            t -= step
    return n  # fall back to the full (unblocked) dimension


def _pick_kv_tile(n, preferred):
    """kv tile is the lane dim of the (tq, tk) score / mask tiles: x128 or full."""
    if n <= preferred:
        return n
    t = preferred - (preferred % 128)
    while t >= 128:
        if n % t == 0:
            return t
        t -= 128
    # TODO(synk): for T not divisible by 128, padding T with a masked tail would
    # be preferable to falling back to an unblocked kv dimension.
    return n


# ---------------------------------------------------------------------------
# Projection kernel:  x @ W  (run once per tensor, hoisted out of the flash loop)
# ---------------------------------------------------------------------------
def _proj_kernel(x_ref, w_ref, o_ref):
    o_ref[...] = jnp.dot(x_ref[...].astype(w_ref.dtype), w_ref[...],
                         preferred_element_type=jnp.float32).astype(o_ref.dtype)


def _project(x, w, *, block_rows):
    """(B, T, dmodel) @ (dmodel, d_k) -> (B, T, d_k) in w.dtype."""
    B, T, dmodel = x.shape
    d_out = w.shape[1]
    tr = _pick_row_tile(T, block_rows)
    # TODO(synk): dmodel is kept unblocked; for very large dmodel a k-blocked
    # accumulator variant would reduce per-step VMEM.
    return pl.pallas_call(
        _proj_kernel,
        out_shape=jax.ShapeDtypeStruct((B, T, d_out), w.dtype),
        grid_spec=pltpu.PrefetchScalarGridSpec(
            num_scalar_prefetch=0,
            grid=(B, T // tr),
            in_specs=[
                pl.BlockSpec((pl.Squeezed(), tr, dmodel), lambda b, i: (b, i, 0)),
                pl.BlockSpec((dmodel, d_out), lambda b, i: (0, 0)),
            ],
            out_specs=pl.BlockSpec((pl.Squeezed(), tr, d_out),
                                   lambda b, i: (b, i, 0))),
        compiler_params=pltpu.CompilerParams(
            dimension_semantics=("parallel", "parallel")),
    )(x, w)


# ---------------------------------------------------------------------------
# Flash-attention kernel over pre-projected qp / kp / vp
# ---------------------------------------------------------------------------
def _make_attn_kernel(*, causal, has_mask, tq, tk):
    def kernel(*refs):
        if has_mask:
            qp_ref, kp_ref, vp_ref, mask_ref, o_ref, m_s, l_s, acc_s = refs
        else:
            qp_ref, kp_ref, vp_ref, o_ref, m_s, l_s, acc_s = refs
            mask_ref = None

        qi = pl.program_id(1)
        ki = pl.program_id(2)

        @pl.when(ki == 0)
        def _init():
            m_s[...] = jnp.full_like(m_s, _MASK_VALUE)
            l_s[...] = jnp.zeros_like(l_s)
            acc_s[...] = jnp.zeros_like(acc_s)

        def _step():
            # Scores (tq, tk): contract the d_k axis of both operands directly
            # (no explicit transpose of kp; bf16 MXU inputs, f32 accumulation).
            s = jax.lax.dot_general(
                qp_ref[...], kp_ref[...],
                dimension_numbers=(((1,), (1,)), ((), ())),
                preferred_element_type=jnp.float32)

            if has_mask:
                # TODO(synk): rows masked across ALL kv tiles yield uniform
                # attention instead of the reference's NaN (finite fill,
                # flash-attention convention).
                s = jnp.where(mask_ref[...] == 0, _MASK_VALUE, s)
            elif causal:
                # Only blocks at/after the diagonal reach here (fully-above
                # blocks are skipped below); the select is cheap VPU work
                # relative to the two matmuls.
                rows = qi * tq + jax.lax.broadcasted_iota(jnp.int32, (tq, tk), 0)
                cols = ki * tk + jax.lax.broadcasted_iota(jnp.int32, (tq, tk), 1)
                s = jnp.where(rows >= cols, s, _MASK_VALUE)

            # Online softmax update.
            m_prev = m_s[...]
            m_new = jnp.maximum(m_prev, jnp.max(s, axis=-1, keepdims=True))
            alpha = jnp.exp(m_prev - m_new)
            p = jnp.exp(s - m_new)
            l_s[...] = alpha * l_s[...] + jnp.sum(p, axis=-1, keepdims=True)
            acc_s[...] = alpha * acc_s[...] + jnp.dot(
                p.astype(vp_ref.dtype), vp_ref[...],
                preferred_element_type=jnp.float32)
            m_s[...] = m_new

        if causal:
            # Skip kv tiles entirely above the diagonal: the last row of this q
            # tile is qi*tq + tq - 1, the first column of this kv tile is ki*tk.
            pl.when(ki * tk <= qi * tq + (tq - 1))(_step)
        else:
            _step()

        @pl.when(ki == pl.num_programs(2) - 1)
        def _finalize():
            inv_l = pl.reciprocal(l_s[...], approx=False)
            o_ref[...] = (acc_s[...] * inv_l).astype(o_ref.dtype)

    return kernel


def head_forward(q, k, v, wq_t, wk_t, wv_t, mask=None, *,
                 is_causal=False, use_bf16=True, block_q=None, block_k=None):
    """Single attention head matching PyTorch `Head.forward`.

    q:                (B, Tq, dmodel) float32
    k, v:             (B, Tkv, dmodel) float32
    wq_t/wk_t/wv_t:   (dmodel, d_k) float32 (transposed nn.Linear weights)
    mask:             optional (Tq, Tkv), (1, Tq, Tkv) or (B, Tq, Tkv);
                      entries == 0 are masked (reference: masked_fill -> -inf).
    is_causal:        generate a lower-triangular mask in-kernel (no HBM mask
                      traffic); mutually exclusive with `mask`.
    use_bf16:         bf16 MXU inputs with f32 accumulation.
    Returns:          (B, Tq, d_k) float32
    """
    B, Tq, dmodel = q.shape
    if k.shape != v.shape or k.shape[0] != B or k.shape[2] != dmodel:
        raise ValueError(f"incompatible shapes q={q.shape} k={k.shape} v={v.shape}")
    Tkv = k.shape[1]
    d_k = wq_t.shape[1]
    if is_causal and mask is not None:
        raise ValueError("pass either `mask` or `is_causal`, not both")
    if is_causal and Tq != Tkv:
        raise ValueError("is_causal requires Tq == Tkv")

    wdt = jnp.bfloat16 if use_bf16 else jnp.float32
    blk = _default_block()
    bq = block_q or blk
    bk = block_k or blk

    # Reference scales by k.shape[-1] / sqrt(d_k) == sqrt(d_k) (reproduced
    # faithfully; note this is NOT the standard 1/sqrt(d_k)).  Fold it into Wq
    # once at trace time instead of per q tile.
    scale = float(d_k) / math.sqrt(float(d_k))

    # Hoisted projections: each of q / k / v is projected exactly once.
    qp = _project(q, (jnp.asarray(wq_t) * scale).astype(wdt), block_rows=bq)
    kp = _project(k, jnp.asarray(wk_t).astype(wdt), block_rows=bk)
    vp = _project(v, jnp.asarray(wv_t).astype(wdt), block_rows=bk)

    tq = _pick_row_tile(Tq, bq)
    tk = _pick_kv_tile(Tkv, bk)

    in_specs = [
        pl.BlockSpec((pl.Squeezed(), tq, d_k), lambda b, qi, ki: (b, qi, 0)),  # qp
        pl.BlockSpec((pl.Squeezed(), tk, d_k), lambda b, qi, ki: (b, ki, 0)),  # kp
        pl.BlockSpec((pl.Squeezed(), tk, d_k), lambda b, qi, ki: (b, ki, 0)),  # vp
    ]
    args = [qp, kp, vp]

    has_mask = mask is not None
    if has_mask:
        m = jnp.asarray(mask)
        if m.ndim == 2:
            m = m[None]
        if m.shape[0] not in (1, B) or m.shape[-2:] != (Tq, Tkv):
            raise ValueError(f"mask shape {m.shape} not usable for {(B, Tq, Tkv)}")
        mask_arr = (m != 0).astype(jnp.int8)       # int8: 4x less HBM traffic than int32
        if m.shape[0] == 1:                        # shared mask: de-dup across batch
            m_map = lambda b, qi, ki: (0, qi, ki)
        else:
            m_map = lambda b, qi, ki: (b, qi, ki)
        in_specs.append(pl.BlockSpec((pl.Squeezed(), tq, tk), m_map))
        args.append(mask_arr)

    kernel = _make_attn_kernel(causal=is_causal, has_mask=has_mask, tq=tq, tk=tk)

    # NOTE (v7x): B * (Tq//tq) should ideally be even so both TensorCores get work.
    out = pl.pallas_call(
        kernel,
        out_shape=jax.ShapeDtypeStruct((B, Tq, d_k), jnp.float32),
        grid_spec=pltpu.PrefetchScalarGridSpec(
            num_scalar_prefetch=0,
            grid=(B, Tq // tq, Tkv // tk),
            in_specs=in_specs,
            out_specs=pl.BlockSpec((pl.Squeezed(), tq, d_k),
                                   lambda b, qi, ki: (b, qi, 0)),
            scratch_shapes=[
                pltpu.VMEM((tq, 1), jnp.float32),    # running max
                pltpu.VMEM((tq, 1), jnp.float32),    # running sum
                pltpu.VMEM((tq, d_k), jnp.float32),  # output accumulator
            ]),
        compiler_params=pltpu.CompilerParams(
            dimension_semantics=("parallel", "parallel", "arbitrary")),
    )(*args)
    return out


def head_reference(q, k, v, wq_t, wk_t, wv_t, mask=None):
    d_k = wq_t.shape[1]
    qp = q @ wq_t
    kp = k @ wk_t
    vp = v @ wv_t
    w = qp @ jnp.swapaxes(kp, -2, -1) * kp.shape[-1] / math.sqrt(d_k)
    if mask is not None:
        w = jnp.where(mask == 0, -jnp.inf, w)
    w = jax.nn.softmax(w, axis=-1)
    return w @ vp


if __name__ == "__main__":
    # Small shapes consistent with the module: batch=2, seq=8, dmodel=32, d_k=16.
    B, T, dmodel, d_k = 2, 8, 32, 16

    key = jax.random.PRNGKey(0)
    kq, kk, kv, kwq, kwk, kwv = jax.random.split(key, 6)

    q = jax.random.normal(kq, (B, T, dmodel), dtype=jnp.float32)
    k = jax.random.normal(kk, (B, T, dmodel), dtype=jnp.float32)
    v = jax.random.normal(kv, (B, T, dmodel), dtype=jnp.float32)

    # Deterministic "nn.Linear" weights, stored transposed as (dmodel, d_k).
    bound = 1.0 / math.sqrt(dmodel)
    wq_t = jax.random.uniform(kwq, (dmodel, d_k), jnp.float32, -bound, bound)
    wk_t = jax.random.uniform(kwk, (dmodel, d_k), jnp.float32, -bound, bound)
    wv_t = jax.random.uniform(kwv, (dmodel, d_k), jnp.float32, -bound, bound)

    causal2d = jnp.tril(jnp.ones((T, T), dtype=jnp.float32))
    ref_causal = head_reference(q, k, v, wq_t, wk_t, wv_t, mask=causal2d)
    ref_nomask = head_reference(q, k, v, wq_t, wk_t, wv_t)

    # 1) f32 path, causal mask generated in-kernel (zero mask HBM traffic).
    out1 = jax.block_until_ready(
        head_forward(q, k, v, wq_t, wk_t, wv_t, is_causal=True, use_bf16=False))
    assert out1.shape == (B, T, d_k)
    assert jnp.allclose(out1, ref_causal, atol=1e-4, rtol=1e-4)

    # 2) f32 path, explicit shared (T, T) int8 mask (de-duplicated across batch).
    out2 = jax.block_until_ready(
        head_forward(q, k, v, wq_t, wk_t, wv_t, mask=causal2d, use_bf16=False))
    assert jnp.allclose(out2, ref_causal, atol=1e-4, rtol=1e-4)

    # 3) f32 path, explicit per-batch (B, T, T) mask.
    mask_b = jnp.broadcast_to(causal2d, (B, T, T))
    out3 = jax.block_until_ready(
        head_forward(q, k, v, wq_t, wk_t, wv_t, mask=mask_b, use_bf16=False))
    assert jnp.allclose(out3, ref_causal, atol=1e-4, rtol=1e-4)

    # 4) f32 path, no mask at all (mask input skipped entirely).
    out4 = jax.block_until_ready(
        head_forward(q, k, v, wq_t, wk_t, wv_t, use_bf16=False))
    assert jnp.allclose(out4, ref_nomask, atol=1e-4, rtol=1e-4)

    # 5) default bf16 MXU path (f32 accumulation) — looser tolerance.
    out5 = jax.block_until_ready(
        head_forward(q, k, v, wq_t, wk_t, wv_t, is_causal=True))
    assert out5.shape == (B, T, d_k)
    assert jnp.allclose(out5, ref_causal, atol=1e-1, rtol=1e-1)

    # 6) moderately larger shapes to exercise the tiled grid, the hoisted
    #    projections and the causal kv-tile skip (grid = (2, 2, 2)).
    B2, T2, dm2, dk2 = 2, 256, 64, 64
    k2a, k2b, k2c, k2d, k2e, k2f = jax.random.split(jax.random.PRNGKey(1), 6)
    q2 = jax.random.normal(k2a, (B2, T2, dm2), dtype=jnp.float32)
    k2 = jax.random.normal(k2b, (B2, T2, dm2), dtype=jnp.float32)
    v2 = jax.random.normal(k2c, (B2, T2, dm2), dtype=jnp.float32)
    b2 = 1.0 / math.sqrt(dm2)
    wq2 = jax.random.uniform(k2d, (dm2, dk2), jnp.float32, -b2, b2)
    wk2 = jax.random.uniform(k2e, (dm2, dk2), jnp.float32, -b2, b2)
    wv2 = jax.random.uniform(k2f, (dm2, dk2), jnp.float32, -b2, b2)
    causal_big = jnp.tril(jnp.ones((T2, T2), dtype=jnp.float32))
    ref_big = head_reference(q2, k2, v2, wq2, wk2, wv2, mask=causal_big)
    out_big = jax.block_until_ready(
        head_forward(q2, k2, v2, wq2, wk2, wv2, is_causal=True,
                     use_bf16=False, block_q=128, block_k=128))
    assert out_big.shape == (B2, T2, dk2)
    assert jnp.allclose(out_big, ref_big, atol=2e-4, rtol=2e-4)

    print("KERNEL_OK")
</pallas_src>

<mosaic_0001>
module attributes {stable_mosaic.version = 11 : i64} {
  func.func @_proj_kernel(%arg0: i32, %arg1: i32, %arg2: memref<1x8x32xf32, #tpu.memory_space<vmem>>, %arg3: memref<32x16xf32, #tpu.memory_space<vmem>>, %arg4: memref<1x8x16xf32, #tpu.memory_space<vmem>>) attributes {dimension_semantics = [#tpu.dimension_semantics<parallel>, #tpu.dimension_semantics<parallel>], iteration_bounds = array<i64: 2, 1>, scalar_prefetch = 0 : i64, scratch_operands = 0 : i64, tpu.core_type = #tpu.core_type<tc>, window_params = [{transform_indices = @transform_0, window_bounds = array<i64: 1, 8, 32>}, {pipeline_mode = #tpu.pipeline_mode<synchronous>, transform_indices = @transform_1, window_bounds = array<i64: 32, 16>}, {transform_indices = @transform_2, window_bounds = array<i64: 1, 8, 16>}]} {
    %c0 = arith.constant 0 : index
    %c0_0 = arith.constant 0 : index
    %c0_1 = arith.constant 0 : index
    %0 = vector.load %arg2[%c0, %c0_0, %c0_1] : memref<1x8x32xf32, #tpu.memory_space<vmem>>, vector<1x8x32xf32>
    %1 = vector.shape_cast %0 : vector<1x8x32xf32> to vector<8x32xf32>
    %c0_2 = arith.constant 0 : index
    %c0_3 = arith.constant 0 : index
    %2 = vector.load %arg3[%c0_2, %c0_3] : memref<32x16xf32, #tpu.memory_space<vmem>>, vector<32x16xf32>
    %cst = arith.constant dense<0.000000e+00> : vector<8x16xf32>
    %3 = tpu.matmul %1, %2, %cst {dimension_numbers = #tpu.dot_dimension_numbers<[1], [0], [0], [1], [0, 0, 1, 1], [], []>} : vector<8x32xf32>, vector<32x16xf32>, vector<8x16xf32> -> vector<8x16xf32>
    %c0_4 = arith.constant 0 : index
    %c0_5 = arith.constant 0 : index
    %c0_6 = arith.constant 0 : index
    %4 = vector.load %arg4[%c0_4, %c0_5, %c0_6] : memref<1x8x16xf32, #tpu.memory_space<vmem>>, vector<1x8x16xf32>
    %5 = vector.shape_cast %4 : vector<1x8x16xf32> to vector<8x16xf32>
    %6 = vector.shape_cast %3 : vector<8x16xf32> to vector<1x8x16xf32>
    tpu.vector_store %arg4[%c0_4, %c0_5, %c0_6], %6 {strides = array<i32>} : memref<1x8x16xf32, #tpu.memory_space<vmem>>, vector<1x8x16xf32>,
    return
  }
  func.func @transform_0(%arg0: i32, %arg1: i32) -> (i32, i32, i32) {
    %c0_i32 = arith.constant 0 : i32
    %c0_i32_0 = arith.constant 0 : i32
    return %arg0, %arg1, %c0_i32 : i32, i32, i32
  }
  func.func @transform_1(%arg0: i32, %arg1: i32) -> (i32, i32) {
    %c0_i32 = arith.constant 0 : i32
    %c0_i32_0 = arith.constant 0 : i32
    %c0_i32_1 = arith.constant 0 : i32
    return %c0_i32, %c0_i32_0 : i32, i32
  }
  func.func @transform_2(%arg0: i32, %arg1: i32) -> (i32, i32, i32) {
    %c0_i32 = arith.constant 0 : i32
    %c0_i32_0 = arith.constant 0 : i32
    return %arg0, %arg1, %c0_i32 : i32, i32, i32
  }
}

</mosaic_0001>

<llo_original>
// kernel: tpu_custom_call.1
$region0: #{tpu_custom_call.1}
  #allocation0 [shape = 'u32[]', space=smem, size = 0x4, offset = 0x4, fixed_abs, tag = 'smem constant byte address 0x4 - core index']
  #allocation1 [shape = 'u32[72,128]{1,0:T(1,128)}', space=vmem, size = 0x9000, scoped, tag = 'internal scratch']
  %s0 = inlined_call_operand.vmem [shape: f32[2,8,32], index: 0, kind: input, shape index: {}]
  %s1 = inlined_call_operand.vmem [shape: f32[32,16], index: 1, kind: input, shape index: {}]
  %s2 = inlined_call_operand.hbm [shape: f32[2,8,16], index: 2, kind: output, shape index: {}]
  %s3 = sld [smem:[#allocation0]]
  $region41: #{tpu_custom_call.1} parent=0
    _
  %s5 = ssub.s32 1, %s3
  %s6 = scalar_select 0, %s5, %s3
  $region1: #{tpu_custom_call.1} parent=0
    #allocation2 [shape = 'u8[8192]{0}', space=vmem, size = 0x2000, scoped, tag = 'output window, operand 0']
    #allocation3 [shape = 's32[2]{0}', space=sflag, size = 0x8, scoped, tag = 'scoped memory for tpu_custom_call.1']
    %7 = vsyncpa [#allocation3], 0
    %s8 = scalar_lea.sflag [#allocation3], 1
    %9 = vsyncpa %s8, 0
    loop: start=0, step=1, limit=4
    $region2: #{tpu_custom_call.1} parent=1 // loop_pre_header
      _
    $region3: #{tpu_custom_call.1} parent=1 // loop_header
      %s11 = sphi 0, %s15
      %p12 = scmp.ge.s32.totalorder %s11, 4
      %s18 = sphi 0, %s30
      %s19 = sphi 0, %s26
      %s20 = sphi 0, %s18
      %s21 = sphi 0, %s19
      %s22 = sphi 0, %s20
      %s23 = sphi 0, %s21
      %s35 = sphi 0, %s37
      %s38 = sphi 0, %s35
      %s39 = sphi 0, %s38
      %s55 = sphi 0, %s39
      %s59 = sphi 0, %s59
      %s61 = sphi 0, %s59
      %s62 = sphi 0, %s61
      %s76 = sphi 0, %s62
      %s84 = sphi 0, %s86
      %s87 = sphi 0, %s84
      %s88 = sphi 0, %s87
      %s104 = sphi 0, %s88
    $region4: #{tpu_custom_call.1} parent=1 // loop_header_branch
      %14 = sbr.rel (%p12) target = $region8
    $region5: #{tpu_custom_call.1} parent=1 // loop_body
      %s16 = ssub.s32 %s11, 1
      %s17 = ssub.s32 %s11, 2
      %s24 = sadd.s32 1, %s19
      %p25 = scmp.ge.s32.totalorder %s24, 1
      %s26 = scalar_select %p25, 0, %s24
      %s27 = sadd.s32 1, %s18
      %s28 = scalar_select %p25, %s27, %s18
      %p29 = scmp.ge.s32.totalorder %s28, 2
      %s30 = scalar_select %p29, 0, %s28
      %s31 = ssub.s32 %s18, %s30
      %s32 = ssub.s32 %s19, %s26
      %s33 = sor.u32 %s31, %s32
      %p34 = scmp.eq.s32.totalorder %s33, 0
      %s36 = sadd.s32 %s35, 1
      %s37 = scalar_select %p34, %s35, %s36
      %p40 = pneg %p34
      %p41 = scmp.eq.s32.totalorder %s11, 1
      %p42 = por %p40, %p41
      %p43 = scmp.ne.s32.totalorder %s35, %s38
      %p44 = scmp.eq.s32.totalorder %s11, 0
      %p45 = por %p43, %p44
      %p46 = scmp.ne.s32.totalorder %s35, %s38
      %p47 = scmp.eq.s32.totalorder %s16, 1
      %p48 = por %p46, %p47
      %p49 = scmp.ne.s32.totalorder %s38, %s39
      %p50 = scmp.eq.s32.totalorder %s16, 0
      %p51 = por %p49, %p50
      %p52 = scmp.ne.s32.totalorder %s38, %s39
      %p53 = scmp.eq.s32.totalorder %s17, 1
      %p54 = por %p52, %p53
      %p56 = scmp.ne.s32.totalorder %s39, %s55
      %p57 = scmp.eq.s32.totalorder %s17, 0
      %p58 = por %p56, %p57
      %s60 = sadd.s32 %s59, 1
      %p63 = scmp.eq.s32.totalorder %s11, 1
      %p64 = scmp.ne.s32.totalorder %s59, %s61
      %p65 = scmp.eq.s32.totalorder %s11, 0
      %p66 = por %p64, %p65
      %p67 = scmp.ne.s32.totalorder %s59, %s61
      %p68 = scmp.eq.s32.totalorder %s16, 1
      %p69 = por %p67, %p68
      %p70 = scmp.ne.s32.totalorder %s61, %s62
      %p71 = scmp.eq.s32.totalorder %s16, 0
      %p72 = por %p70, %p71
      %p73 = scmp.ne.s32.totalorder %s61, %s62
      %p74 = scmp.eq.s32.totalorder %s17, 1
      %p75 = por %p73, %p74
      %p77 = scmp.ne.s32.totalorder %s62, %s76
      %p78 = scmp.eq.s32.totalorder %s17, 0
      %p79 = por %p77, %p78
      %s80 = ssub.s32 %s18, %s30
      %s81 = ssub.s32 %s19, %s26
      %s82 = sor.u32 %s80, %s81
      %p83 = scmp.eq.s32.totalorder %s82, 0
      %s85 = sadd.s32 %s84, 1
      %s86 = scalar_select %p83, %s84, %s85
      %p89 = pneg %p83
      %p90 = scmp.eq.s32.totalorder %s11, 1
      %p91 = por %p89, %p90
      %p92 = scmp.ne.s32.totalorder %s84, %s87
      %p93 = scmp.eq.s32.totalorder %s11, 0
      %p94 = por %p92, %p93
      %p95 = scmp.ne.s32.totalorder %s84, %s87
      %p96 = scmp.eq.s32.totalorder %s16, 1
      %p97 = por %p95, %p96
      %p98 = scmp.ne.s32.totalorder %s87, %s88
      %p99 = scmp.eq.s32.totalorder %s16, 0
      %p100 = por %p98, %p99
      %p101 = scmp.ne.s32.totalorder %s87, %s88
      %p102 = scmp.eq.s32.totalorder %s17, 1
      %p103 = por %p101, %p102
      %p105 = scmp.ne.s32.totalorder %s88, %s104
      %p106 = scmp.eq.s32.totalorder %s17, 0
      %p107 = por %p105, %p106
      %p108 = scmp.le.s32.totalorder 1, %s11
      %p109 = scmp.lt.s32.totalorder %s11, 3
      %p110 = pnand %p108, %p109
      %p111 = pneg %p110
      // Predicated region
      $region9: #{tpu_custom_call.1} parent=5 // pred_check
        _
      $region10: #{tpu_custom_call.1} parent=5 // pred_check_branch
        %113 = sbr.rel (%p110) target = $region12
      $region11: #{tpu_custom_call.1} parent=5 // pred_region
        %s114 = ssub.s32 %s11, 1
        // Predicated region
        $region13: #{tpu_custom_call.1} parent=11 // pred_check
          %p115 = pneg %p72
        $region14: #{tpu_custom_call.1} parent=11 // pred_check_branch
          %117 = sbr.rel (%p115) target = $region16
        $region15: #{tpu_custom_call.1} parent=11 // pred_region
          _
        $region16: #{tpu_custom_call.1} parent=11 // pred_fallthru
          _
      $region12: #{tpu_custom_call.1} parent=5 // pred_fallthru
        _
      %p118 = scmp.lt.s32.totalorder %s11, 2
      // Predicated region
      $region17: #{tpu_custom_call.1} parent=5 // pred_check
        %p119 = pneg %p118
      $region18: #{tpu_custom_call.1} parent=5 // pred_check_branch
        %121 = sbr.rel (%p119) target = $region20
      $region19: #{tpu_custom_call.1} parent=5 // pred_region
        // Predicated region
        $region21: #{tpu_custom_call.1} parent=19 // pred_check
          %p122 = pneg %p45
        $region22: #{tpu_custom_call.1} parent=19 // pred_check_branch
          %124 = sbr.rel (%p122) target = $region24
        $region23: #{tpu_custom_call.1} parent=19 // pred_region
          %p125 = scmp.lt.s32.totalorder %s18, 1
          %s126 = scalar_select %p125, %s18, 1
          %p127 = scmp.lt.s32.totalorder %s19, 0
          %s128 = scalar_select %p127, %s19, 0
          %s129 = sadd.s32 %s128, %s126
          %s130 = smul.addr %s129, 8
          %s131 = scalar_lea.vmem %s0, %s130
        $region24: #{tpu_custom_call.1} parent=19 // pred_fallthru
          _
      $region20: #{tpu_custom_call.1} parent=5 // pred_fallthru
        _
      %p132 = scmp.le.s32.totalorder 1, %s11
      %p133 = scmp.lt.s32.totalorder %s11, 3
      %p134 = pnand %p132, %p133
      %p135 = pneg %p134
      // Predicated region
      $region25: #{tpu_custom_call.1} parent=5 // pred_check
        _
      $region26: #{tpu_custom_call.1} parent=5 // pred_check_branch
        %137 = sbr.rel (%p134) target = $region28
      $region27: #{tpu_custom_call.1} parent=5 // pred_region
        %s138 = ssub.s32 %s11, 1
        %p139 = scmp.lt.s32.totalorder %s20, 1
        %s140 = scalar_select %p139, %s20, 1
        %p141 = scmp.lt.s32.totalorder %s21, 0
        %s142 = scalar_select %p141, %s21, 0
        %s143 = sadd.s32 %s142, %s140
        %s144 = smul.addr %s143, 8
        %s145 = scalar_lea.vmem %s0, %s144
        %p146 = pneg %p51
        %p147 = pneg %p48
        %p148 = pneg %p72
        %p149 = pneg %p69
        %p150 = pneg %p100
        %p151 = pneg %p97
        %s152 = sand.u32 %s87, 1
        %s153 = scalar_lea.sflag [#allocation3], %s152
        %s154 = sand.u32 %s87, 1
        %s155 = smul.addr %s154, 8
        %s156 = scalar_lea.vmem [#allocation2], %s155
        %p157 = scmp.lt.s32.totalorder %s20, 1
        %s158 = scalar_select %p157, %s20, 1
        %p159 = scmp.lt.s32.totalorder %s21, 0
        %s160 = scalar_select %p159, %s21, 0
        %s161 = sadd.s32 %s160, %s158
        %s162 = smul.addr %s161, 8
        %s163 = scalar_lea.vmem %s0, %s162
        %v164 = vld [vmem:[%s163] sm:$0xff]
        %v165 = vld [vmem:[%s1] sm:$0xff]
        %v166 = vld [vmem:[%s1 + $0x8] sm:$0xff]
        %v167 = vld [vmem:[%s1 + $0x10] sm:$0xff]
        %v168 = vld [vmem:[%s1 + $0x18] sm:$0xff]
        %vm169 = vcmask 261120
        %v171 = vsel %vm169, %v164, 0
        %173 = vmatpush.msra.mxu0 0.0
        %174 = vmatpush.msra.mxu0 0.0
        %175 = vmatpush.msra.mxu0 0.0
        %176 = vmatpush.msra.mxu0 0.0
        %177 = vmatpush.msra.mxu0 0.0
        %178 = vmatpush.msra.mxu0 0.0
        %179 = vmatpush.msra.mxu0 0.0
        %180 = vmatpush.msra.mxu0 0.0
        %181 = vmatpush.msra.mxu0 0.0
        %182 = vmatpush.msra.mxu0 0.0
        %183 = vmatpush.msra.mxu0 0.0
        %184 = vmatpush.msra.mxu0 0.0
        %185 = vmatpush.msra.mxu0 %v168
        %186 = vmatpush.msra.mxu0 %v167
        %187 = vmatpush.msra.mxu0 %v166
        %188 = vmatpush.msra.mxu0 %v165
        %189 = vmatmul.f32.gmra.mxu0 %v171
        %v190 = vpop.f32.mrf.mxu0
        %v191 = vadd.f32 0.0, %v190
        %192 = vdwg.mxu0
        %vm193 = vcmask 130048
        %194 = vst.msk [vmem:[%s156] sm:$0xff] %vm193, %v191
        %s195 = sand.u32 %s87, 1
        %s196 = scalar_lea.sflag [#allocation3], %s195
        %s197 = sand.u32 %s87, 1
        %s198 = smul.addr %s197, 8
        %s199 = scalar_lea.vmem [#allocation2], %s198
        // Predicated region
        $region29: #{tpu_custom_call.1} parent=27 // pred_check
          %p200 = pneg %p97
        $region30: #{tpu_custom_call.1} parent=27 // pred_check_branch
          %202 = sbr.rel (%p200) target = $region32
        $region31: #{tpu_custom_call.1} parent=27 // pred_region
          %204 = vsyncadd %s196, 0
          %s205 = sadd.s32 %s21, %s20
          %s206 = smul.addr %s205, 8
          %s207 = scalar_lea.hbm %s2, %s206
          %s209 = sshll.u32 %s199, 4
          %s210 = int_to_ptr.vmem [resolvable:$true] %s209
          %s211 = sshll.u32 %s207, 4
          %s212 = int_to_ptr.hbm [resolvable:$true] %s211
          %214 = dma.vmem_to_hbm [thread:$0]  %s210, 128, %s212, %s196
        $region32: #{tpu_custom_call.1} parent=27 // pred_fallthru
          _
      $region28: #{tpu_custom_call.1} parent=5 // pred_fallthru
        _
      %p215 = scmp.le.s32.totalorder 2, %s11
      // Predicated region
      $region33: #{tpu_custom_call.1} parent=5 // pred_check
        %p216 = pneg %p215
      $region34: #{tpu_custom_call.1} parent=5 // pred_check_branch
        %218 = sbr.rel (%p216) target = $region36
      $region35: #{tpu_custom_call.1} parent=5 // pred_region
        %s219 = ssub.s32 %s11, 2
        // Predicated region
        $region37: #{tpu_custom_call.1} parent=35 // pred_check
          %p220 = pneg %p103
        $region38: #{tpu_custom_call.1} parent=35 // pred_check_branch
          %222 = sbr.rel (%p220) target = $region40
        $region39: #{tpu_custom_call.1} parent=35 // pred_region
          %s223 = sand.u32 %s88, 1
          %s224 = scalar_lea.sflag [#allocation3], %s223
          %s225 = sand.u32 %s88, 1
          %s226 = smul.addr %s225, 8
          %s227 = scalar_lea.vmem [#allocation2], %s226
          %229 = dma.done %s224, 128
        $region40: #{tpu_custom_call.1} parent=35 // pred_fallthru
          _
      $region36: #{tpu_custom_call.1} parent=5 // pred_fallthru
        _
    $region6: #{tpu_custom_call.1} parent=1 // loop_footer
      %s15 = sadd.s32 1, %s11
    $region7: #{tpu_custom_call.1} parent=1 // loop_footer_branch
      %10 = sbr.rel target = $region3
    $region8: #{tpu_custom_call.1} parent=1 // loop_exit
      _
    %230 = vsyncpa [#allocation3], 1
    %s231 = scalar_lea.sflag [#allocation3], 1
    %232 = vsyncpa %s231, 1

</llo_original>
